<compile_context>
chip_gen: v7x
topology: tpu7x:2x2x1
jax: 0.10.0
libtpu: 0.0.40
codegen_flags: <defaults>
</compile_context>

<pallas_src>
import functools

import jax
import jax.numpy as jnp
from jax.experimental import pallas as pl
from jax.experimental.pallas import tpu as pltpu


def head_kernel(x_ref, w1_ref, b1_ref, w2_ref, b2_ref, w3_ref, b3_ref, o_ref):
    # x_ref: (TILE_B, 128) bf16 ; w1: (128, 64) bf16 ; w2: (64, 64) bf16
    # b1/b2/w3_row: (1, 64) f32 ; b3: (1,) f32 in SMEM ; o_ref: (TILE_B, 1) f32
    x = x_ref[...]

    # Layer 1: MXU matmul (bf16 in, f32 accumulate), f32 bias + ReLU.
    h1 = jnp.dot(x, w1_ref[...], preferred_element_type=jnp.float32)
    h1 = jnp.maximum(h1 + b1_ref[...], 0.0)
    h1 = h1.astype(jnp.bfloat16)

    # Layer 2: MXU matmul, f32 bias + ReLU.
    h2 = jnp.dot(h1, w2_ref[...], preferred_element_type=jnp.float32)
    h2 = jnp.maximum(h2 + b2_ref[...], 0.0)

    # Layer 3 (out_dim = 1): VPU multiply + lane reduction instead of an
    # N=1 MXU push; frees the MXU/result-FIFO path and uses otherwise-idle
    # VPU/XLU slots.
    out = jnp.sum(h2 * w3_ref[...], axis=-1, keepdims=True) + b3_ref[0]

    o_ref[...] = out.astype(o_ref.dtype)


def _round_up(n, m):
    return ((n + m - 1) // m) * m


@functools.partial(jax.jit, static_argnames=("tile_b",))
def head_forward(x, w1, b1, w2, b2, w3, b3, *, tile_b=4096):
    """Forward pass of the Head MLP.

    x  : (B, 128)   embeddings (any float dtype; cast to bf16 for the stream)
    w1 : (128, 64)  b1: (64,)
    w2 : (64, 64)   b2: (64,)
    w3 : (64, 1)    b3: (1,)
    returns (B, 1) float32 predictions.
    """
    B, D = x.shape
    assert D == 128, D

    # Pick a batch tile: big enough to amortize per-step overhead, small
    # enough that the bf16 double-buffered input slab fits scoped VMEM on
    # v5e / v6e / v7x. Clamp for tiny batches (must stay a multiple of 8).
    tile_b = min(tile_b, _round_up(B, 8))
    b_pad = _round_up(B, tile_b)

    # bf16 embedding stream + bf16 matmul weights; everything else f32.
    x_bf16 = x.astype(jnp.bfloat16)
    if b_pad != B:
        x_bf16 = jnp.pad(x_bf16, ((0, b_pad - B), (0, 0)))
    w1b = w1.astype(jnp.bfloat16)
    w2b = w2.astype(jnp.bfloat16)
    b1r = b1.reshape(1, -1).astype(jnp.float32)
    b2r = b2.reshape(1, -1).astype(jnp.float32)
    w3r = w3.reshape(1, -1).astype(jnp.float32)   # (1, 64) row for VPU path
    b3r = b3.reshape(1).astype(jnp.float32)       # scalar, lives in SMEM

    grid = (b_pad // tile_b,)

    out = pl.pallas_call(
        head_kernel,
        out_shape=jax.ShapeDtypeStruct((b_pad, 1), jnp.float32),
        grid=grid,
        in_specs=[
            pl.BlockSpec((tile_b, 128), lambda i: (i, 0)),   # x: streamed
            pl.BlockSpec((128, 64), lambda i: (0, 0)),        # w1: resident
            pl.BlockSpec((1, 64), lambda i: (0, 0)),          # b1: resident
            pl.BlockSpec((64, 64), lambda i: (0, 0)),         # w2: resident
            pl.BlockSpec((1, 64), lambda i: (0, 0)),          # b2: resident
            pl.BlockSpec((1, 64), lambda i: (0, 0)),          # w3 row: resident
            pl.BlockSpec(memory_space=pltpu.MemorySpace.SMEM),  # b3 scalar
        ],
        out_specs=pl.BlockSpec((tile_b, 1), lambda i: (i, 0)),
        compiler_params=pltpu.CompilerParams(
            dimension_semantics=("parallel",),   # megacore sharding on v7x
        ),
    )(x_bf16, w1b, b1r, w2b, b2r, w3r, b3r)

    return out[:B]


def init_params(key):
    """Deterministic init mimicking nn.Linear defaults (U[-1/sqrt(fan_in), ...]).

    Weights stored as (in_dim, out_dim) so the kernel computes x @ W + b.
    """
    dims = [(128, 64), (64, 64), (64, 1)]
    params = []
    for fin, fout in dims:
        kw, kb, key = jax.random.split(key, 3)
        bound = 1.0 / (fin ** 0.5)
        w = jax.random.uniform(kw, (fin, fout), jnp.float32, -bound, bound)
        b = jax.random.uniform(kb, (fout,), jnp.float32, -bound, bound)
        params += [w, b]
    return params


def reference_forward(x, w1, b1, w2, b2, w3, b3):
    h1 = jnp.maximum(x @ w1 + b1.reshape(1, -1), 0.0)
    h2 = jnp.maximum(h1 @ w2 + b2.reshape(1, -1), 0.0)
    return h2 @ w3 + b3.reshape(1, -1)


if __name__ == "__main__":
    key = jax.random.PRNGKey(0)
    kx, kp = jax.random.split(key)

    B = 8
    x = jax.random.normal(kx, (B, 128), jnp.float32)
    w1, b1, w2, b2, w3, b3 = init_params(kp)

    out = head_forward(x, w1, b1, w2, b2, w3, b3)
    out = jax.block_until_ready(out)

    # Reference in f32 with the same bf16-rounded input the kernel sees.
    # Tolerance loosened for the kernel's bf16 weights / bf16 hidden casts.
    x_rounded = x.astype(jnp.bfloat16).astype(jnp.float32)
    ref = reference_forward(x_rounded, w1, b1, w2, b2, w3, b3)

    assert out.shape == (B, 1), out.shape
    assert jnp.allclose(out, ref, atol=2e-2, rtol=2e-2), (out, ref)

    print("KERNEL_OK")
</pallas_src>

<mosaic_0001>
module attributes {stable_mosaic.version = 11 : i64} {
  func.func @head_kernel(%arg0: i32, %arg1: memref<8x128xbf16, #tpu.memory_space<vmem>>, %arg2: memref<128x64xbf16, #tpu.memory_space<vmem>>, %arg3: memref<1x64xf32, #tpu.memory_space<vmem>>, %arg4: memref<64x64xbf16, #tpu.memory_space<vmem>>, %arg5: memref<1x64xf32, #tpu.memory_space<vmem>>, %arg6: memref<1x64xf32, #tpu.memory_space<vmem>>, %arg7: memref<1xf32, #tpu.memory_space<smem>>, %arg8: memref<8x1xf32, #tpu.memory_space<vmem>>) attributes {dimension_semantics = [#tpu.dimension_semantics<parallel>], iteration_bounds = array<i64: 1>, scalar_prefetch = 0 : i64, scratch_operands = 0 : i64, tpu.core_type = #tpu.core_type<tc>, window_params = [{transform_indices = @transform_0, window_bounds = array<i64: 8, 128>}, {pipeline_mode = #tpu.pipeline_mode<synchronous>, transform_indices = @transform_1, window_bounds = array<i64: 128, 64>}, {pipeline_mode = #tpu.pipeline_mode<synchronous>, transform_indices = @transform_2, window_bounds = array<i64: 1, 64>}, {pipeline_mode = #tpu.pipeline_mode<synchronous>, transform_indices = @transform_3, window_bounds = array<i64: 64, 64>}, {pipeline_mode = #tpu.pipeline_mode<synchronous>, transform_indices = @transform_4, window_bounds = array<i64: 1, 64>}, {pipeline_mode = #tpu.pipeline_mode<synchronous>, transform_indices = @transform_5, window_bounds = array<i64: 1, 64>}, {transform_indices = @transform_6, window_bounds = array<i64: 1>}, {transform_indices = @transform_7, window_bounds = array<i64: 8, 1>}]} {
    %c0 = arith.constant 0 : index
    %c0_0 = arith.constant 0 : index
    %0 = vector.load %arg1[%c0, %c0_0] : memref<8x128xbf16, #tpu.memory_space<vmem>>, vector<8x128xbf16>
    %c0_1 = arith.constant 0 : index
    %c0_2 = arith.constant 0 : index
    %1 = vector.load %arg2[%c0_1, %c0_2] : memref<128x64xbf16, #tpu.memory_space<vmem>>, vector<128x64xbf16>
    %cst = arith.constant dense<0.000000e+00> : vector<8x64xf32>
    %2 = tpu.matmul %0, %1, %cst {dimension_numbers = #tpu.dot_dimension_numbers<[1], [0], [0], [1], [0, 0, 1, 1], [], []>} : vector<8x128xbf16>, vector<128x64xbf16>, vector<8x64xf32> -> vector<8x64xf32>
    %c0_3 = arith.constant 0 : index
    %c0_4 = arith.constant 0 : index
    %3 = vector.load %arg3[%c0_3, %c0_4] : memref<1x64xf32, #tpu.memory_space<vmem>>, vector<1x64xf32>
    %4 = vector.broadcast %3 : vector<1x64xf32> to vector<8x64xf32>
    %5 = arith.addf %2, %4 : vector<8x64xf32>
    %cst_5 = arith.constant 0.000000e+00 : f32
    %6 = vector.broadcast %cst_5 : f32 to vector<8x64xf32>
    %7 = arith.maximumf %5, %6 : vector<8x64xf32>
    %8 = arith.truncf %7 : vector<8x64xf32> to vector<8x64xbf16>
    %c0_6 = arith.constant 0 : index
    %c0_7 = arith.constant 0 : index
    %9 = vector.load %arg4[%c0_6, %c0_7] : memref<64x64xbf16, #tpu.memory_space<vmem>>, vector<64x64xbf16>
    %cst_8 = arith.constant dense<0.000000e+00> : vector<8x64xf32>
    %10 = tpu.matmul %8, %9, %cst_8 {dimension_numbers = #tpu.dot_dimension_numbers<[1], [0], [0], [1], [0, 0, 1, 1], [], []>} : vector<8x64xbf16>, vector<64x64xbf16>, vector<8x64xf32> -> vector<8x64xf32>
    %c0_9 = arith.constant 0 : index
    %c0_10 = arith.constant 0 : index
    %11 = vector.load %arg5[%c0_9, %c0_10] : memref<1x64xf32, #tpu.memory_space<vmem>>, vector<1x64xf32>
    %12 = vector.broadcast %11 : vector<1x64xf32> to vector<8x64xf32>
    %13 = arith.addf %10, %12 : vector<8x64xf32>
    %cst_11 = arith.constant 0.000000e+00 : f32
    %14 = vector.broadcast %cst_11 : f32 to vector<8x64xf32>
    %15 = arith.maximumf %13, %14 : vector<8x64xf32>
    %c0_12 = arith.constant 0 : index
    %c0_13 = arith.constant 0 : index
    %16 = vector.load %arg6[%c0_12, %c0_13] : memref<1x64xf32, #tpu.memory_space<vmem>>, vector<1x64xf32>
    %17 = vector.broadcast %16 : vector<1x64xf32> to vector<8x64xf32>
    %18 = arith.mulf %15, %17 : vector<8x64xf32>
    %cst_14 = arith.constant dense<0.000000e+00> : vector<8xf32>
    %19 = vector.multi_reduction <add>, %18, %cst_14 [1] : vector<8x64xf32> to vector<8xf32>
    %20 = vector.shape_cast %19 : vector<8xf32> to vector<8x1xf32>
    %c0_15 = arith.constant 0 : index
    %21 = memref.load %arg7[%c0_15] : memref<1xf32, #tpu.memory_space<smem>>
    %22 = vector.broadcast %21 : f32 to vector<8x1xf32>
    %23 = arith.addf %20, %22 : vector<8x1xf32>
    %c0_16 = arith.constant 0 : index
    %c0_17 = arith.constant 0 : index
    %24 = vector.load %arg8[%c0_16, %c0_17] : memref<8x1xf32, #tpu.memory_space<vmem>>, vector<8x1xf32>
    tpu.vector_store %arg8[%c0_16, %c0_17], %23 {strides = array<i32>} : memref<8x1xf32, #tpu.memory_space<vmem>>, vector<8x1xf32>,
    return
  }
  func.func @transform_0(%arg0: i32) -> (i32, i32) {
    %c0_i32 = arith.constant 0 : i32
    %c0_i32_0 = arith.constant 0 : i32
    return %arg0, %c0_i32 : i32, i32
  }
  func.func @transform_1(%arg0: i32) -> (i32, i32) {
    %c0_i32 = arith.constant 0 : i32
    %c0_i32_0 = arith.constant 0 : i32
    %c0_i32_1 = arith.constant 0 : i32
    return %c0_i32, %c0_i32_0 : i32, i32
  }
  func.func @transform_2(%arg0: i32) -> (i32, i32) {
    %c0_i32 = arith.constant 0 : i32
    %c0_i32_0 = arith.constant 0 : i32
    %c0_i32_1 = arith.constant 0 : i32
    return %c0_i32, %c0_i32_0 : i32, i32
  }
  func.func @transform_3(%arg0: i32) -> (i32, i32) {
    %c0_i32 = arith.constant 0 : i32
    %c0_i32_0 = arith.constant 0 : i32
    %c0_i32_1 = arith.constant 0 : i32
    return %c0_i32, %c0_i32_0 : i32, i32
  }
  func.func @transform_4(%arg0: i32) -> (i32, i32) {
    %c0_i32 = arith.constant 0 : i32
    %c0_i32_0 = arith.constant 0 : i32
    %c0_i32_1 = arith.constant 0 : i32
    return %c0_i32, %c0_i32_0 : i32, i32
  }
  func.func @transform_5(%arg0: i32) -> (i32, i32) {
    %c0_i32 = arith.constant 0 : i32
    %c0_i32_0 = arith.constant 0 : i32
    %c0_i32_1 = arith.constant 0 : i32
    return %c0_i32, %c0_i32_0 : i32, i32
  }
  func.func @transform_6(%arg0: i32) -> i32 {
    %c0_i32 = arith.constant 0 : i32
    %c0_i32_0 = arith.constant 0 : i32
    return %c0_i32 : i32
  }
  func.func @transform_7(%arg0: i32) -> (i32, i32) {
    %c0_i32 = arith.constant 0 : i32
    %c0_i32_0 = arith.constant 0 : i32
    return %arg0, %c0_i32 : i32, i32
  }
}

</mosaic_0001>

<llo_original>
// kernel: head_forward.1
$region0: #{head_forward.1}
  #allocation0 [shape = 'u32[]', space=smem, size = 0x4, offset = 0x4, fixed_abs, tag = 'smem constant byte address 0x4 - core index']
  #allocation1 [shape = 'u32[144,128]{1,0:T(1,128)}', space=vmem, size = 0x12000, scoped, tag = 'internal scratch']
  #allocation2 [shape = 'f32[1]{0:T(128)S(6)}', space=smem, size = 0x200, scoped, tag = 'scoped memory for head_forward.1']
  %s0 = inlined_call_operand.vmem [shape: bf16[8,128], index: 0, kind: input, shape index: {}]
  %s1 = inlined_call_operand.vmem [shape: bf16[128,64], index: 1, kind: input, shape index: {}]
  %s2 = inlined_call_operand.vmem [shape: f32[1,64], index: 2, kind: input, shape index: {}]
  %s3 = inlined_call_operand.vmem [shape: bf16[64,64], index: 3, kind: input, shape index: {}]
  %s4 = inlined_call_operand.vmem [shape: f32[1,64], index: 4, kind: input, shape index: {}]
  %s5 = inlined_call_operand.vmem [shape: f32[1,64], index: 5, kind: input, shape index: {}]
  %s6 = inlined_call_operand.<no memory space> [shape: f32[1], index: 6, kind: input, shape index: {}]
  %s7 = inlined_call_operand.vmem [shape: f32[8,1], index: 7, kind: output, shape index: {}]
  %s8 = sld [smem:[#allocation0]]
  $region38: #{head_forward.1} parent=0
    _
  %s10 = ssub.s32 1, %s8
  %s11 = scalar_select 0, %s10, %s8
  %12 = sst [smem:[#allocation2]] %s6
  // Predicated region
  $region2: #{head_forward.1} parent=0 // pred_check
    _
  $region3: #{head_forward.1} parent=0 // pred_check_branch
    %14 = sbr.rel (0) target = $region5
  $region4: #{head_forward.1} parent=0 // pred_region
    _
  $region5: #{head_forward.1} parent=0 // pred_fallthru
    _
  // Predicated region
  $region6: #{head_forward.1} parent=0 // pred_check
    _
  $region7: #{head_forward.1} parent=0 // pred_check_branch
    %16 = sbr.rel (0) target = $region9
  $region8: #{head_forward.1} parent=0 // pred_region
    _
  $region9: #{head_forward.1} parent=0 // pred_fallthru
    _
  // Predicated region
  $region10: #{head_forward.1} parent=0 // pred_check
    _
  $region11: #{head_forward.1} parent=0 // pred_check_branch
    %18 = sbr.rel (0) target = $region13
  $region12: #{head_forward.1} parent=0 // pred_region
    _
  $region13: #{head_forward.1} parent=0 // pred_fallthru
    _
  // Predicated region
  $region14: #{head_forward.1} parent=0 // pred_check
    _
  $region15: #{head_forward.1} parent=0 // pred_check_branch
    %20 = sbr.rel (0) target = $region17
  $region16: #{head_forward.1} parent=0 // pred_region
    _
  $region17: #{head_forward.1} parent=0 // pred_fallthru
    _
  // Predicated region
  $region18: #{head_forward.1} parent=0 // pred_check
    _
  $region19: #{head_forward.1} parent=0 // pred_check_branch
    %22 = sbr.rel (0) target = $region21
  $region20: #{head_forward.1} parent=0 // pred_region
    _
  $region21: #{head_forward.1} parent=0 // pred_fallthru
    _
  // Predicated region
  $region22: #{head_forward.1} parent=0 // pred_check
    _
  $region23: #{head_forward.1} parent=0 // pred_check_branch
    %24 = sbr.rel (0) target = $region25
  $region24: #{head_forward.1} parent=0 // pred_region
    _
  $region25: #{head_forward.1} parent=0 // pred_fallthru
    _
  // Predicated region
  $region26: #{head_forward.1} parent=0 // pred_check
    _
  $region27: #{head_forward.1} parent=0 // pred_check_branch
    %26 = sbr.rel (0) target = $region29
  $region28: #{head_forward.1} parent=0 // pred_region
    _
  $region29: #{head_forward.1} parent=0 // pred_fallthru
    _
  %v28 = vld [vmem:[%s0] sm:$0xf]
  %v29 = vld [vmem:[%s1] sm:$0xf]
  %v30 = vld [vmem:[%s1 + $0x4] sm:$0xf]
  %v31 = vld [vmem:[%s1 + $0x8] sm:$0xf]
  %v32 = vld [vmem:[%s1 + $0xc] sm:$0xf]
  %v33 = vld [vmem:[%s1 + $0x10] sm:$0xf]
  %v34 = vld [vmem:[%s1 + $0x14] sm:$0xf]
  %v35 = vld [vmem:[%s1 + $0x18] sm:$0xf]
  %v36 = vld [vmem:[%s1 + $0x1c] sm:$0xf]
  %v37 = vld [vmem:[%s1 + $0x20] sm:$0xf]
  %v38 = vld [vmem:[%s1 + $0x24] sm:$0xf]
  %v39 = vld [vmem:[%s1 + $0x28] sm:$0xf]
  %v40 = vld [vmem:[%s1 + $0x2c] sm:$0xf]
  %v41 = vld [vmem:[%s1 + $0x30] sm:$0xf]
  %v42 = vld [vmem:[%s1 + $0x34] sm:$0xf]
  %v43 = vld [vmem:[%s1 + $0x38] sm:$0xf]
  %v44 = vld [vmem:[%s1 + $0x3c] sm:$0xf]
  %v45 = vld [vmem:[%s2] sm:$0x1]
  %v47 = vlaneseq
  %v48 = vshrl.u32 %v47, 7
  %v49 = vsub.s32 0, %v48
  %v50 = vrot.slane %v45, %v49
  %v68 = vunpack.c.l.b16 %v29
  %v69 = vunpack.c.l.b16 %v30
  %v70 = vunpack.c.l.b16 %v31
  %v71 = vunpack.c.l.b16 %v32
  %v72 = vunpack.c.l.b16 %v33
  %v73 = vunpack.c.l.b16 %v34
  %v74 = vunpack.c.l.b16 %v35
  %v75 = vunpack.c.l.b16 %v36
  %v76 = vunpack.c.l.b16 %v37
  %v77 = vunpack.c.l.b16 %v38
  %v78 = vunpack.c.l.b16 %v39
  %v79 = vunpack.c.l.b16 %v40
  %v80 = vunpack.c.l.b16 %v41
  %v81 = vunpack.c.l.b16 %v42
  %v82 = vunpack.c.l.b16 %v43
  %v83 = vunpack.c.l.b16 %v44
  %v84 = vpack.c.b16 %v69, %v68
  %v85 = vpack.c.b16 %v71, %v70
  %v86 = vpack.c.b16 %v73, %v72
  %v87 = vpack.c.b16 %v75, %v74
  %v88 = vpack.c.b16 %v77, %v76
  %v89 = vpack.c.b16 %v79, %v78
  %v90 = vpack.c.b16 %v81, %v80
  %v91 = vpack.c.b16 %v83, %v82
  %100 = vmatprep.subr.bf16.mxu0 0
  %101 = vmatpush1.bf16.msra.mxu0 %v84
  %102 = vmatprep.subr.bf16.mxu0 0
  %103 = vmatpush1.bf16.msra.mxu0 %v85
  %104 = vmatprep.subr.bf16.mxu0 0
  %105 = vmatpush1.bf16.msra.mxu0 %v86
  %106 = vmatprep.subr.bf16.mxu0 0
  %107 = vmatpush1.bf16.msra.mxu0 %v87
  %108 = vmatprep.subr.bf16.mxu0 0
  %109 = vmatpush1.bf16.msra.mxu0 %v88
  %110 = vmatprep.subr.bf16.mxu0 0
  %111 = vmatpush1.bf16.msra.mxu0 %v89
  %112 = vmatprep.subr.bf16.mxu0 0
  %113 = vmatpush1.bf16.msra.mxu0 %v90
  %114 = vmatprep.subr.bf16.mxu0 0
  %115 = vmatpush1.bf16.msra.mxu0 %v91
  %116 = vmatprep.subr.bf16.mxu0 0
  %117 = vmatpush1.bf16.msra.mxu0 0
  %118 = vmatprep.subr.bf16.mxu0 0
  %119 = vmatpush1.bf16.msra.mxu0 0
  %120 = vmatprep.subr.bf16.mxu0 0
  %121 = vmatpush1.bf16.msra.mxu0 0
  %122 = vmatprep.subr.bf16.mxu0 0
  %123 = vmatpush1.bf16.msra.mxu0 0
  %124 = vmatprep.subr.bf16.mxu0 0
  %125 = vmatpush1.bf16.msra.mxu0 0
  %126 = vmatprep.subr.bf16.mxu0 0
  %127 = vmatpush1.bf16.msra.mxu0 0
  %128 = vmatprep.subr.bf16.mxu0 0
  %129 = vmatpush1.bf16.msra.mxu0 0
  %130 = vmatprep.subr.bf16.mxu0 0
  %131 = vmatpush1.bf16.msra.mxu0 0
  %132 = vmatprep.mubr.bf16.mxu0 0
  %133 = vmatmul.mubr.bf16.gmra.mrb[0].mxu0 %v28
  %v134 = vpop.f32.mrb[0].mxu0
  %v135 = vadd.f32 %v50, %v134
  %v136 = vpop.f32.mrb[0].mxu0
  %v137 = vpop.f32.mrb[0].mxu0
  %v138 = vpop.f32.mrb[0].mxu0
  %139 = vdwg.mxu0
  %v140 = vmax.f32 %v135, 0.0
  %v141 = vpack.c.bf16 %v140, %v140
  %v142 = vld [vmem:[%s3] sm:$0xf]
  %v143 = vld [vmem:[%s3 + $0x4] sm:$0xf]
  %v144 = vld [vmem:[%s3 + $0x8] sm:$0xf]
  %v145 = vld [vmem:[%s3 + $0xc] sm:$0xf]
  %v146 = vld [vmem:[%s3 + $0x10] sm:$0xf]
  %v147 = vld [vmem:[%s3 + $0x14] sm:$0xf]
  %v148 = vld [vmem:[%s3 + $0x18] sm:$0xf]
  %v149 = vld [vmem:[%s3 + $0x1c] sm:$0xf]
  %v150 = vld [vmem:[%s4] sm:$0x1]
  %v152 = vlaneseq
  %v153 = vshrl.u32 %v152, 7
  %v154 = vsub.s32 0, %v153
  %v155 = vrot.slane %v150, %v154
  %v165 = vunpack.c.l.b16 %v142
  %v166 = vunpack.c.l.b16 %v143
  %v167 = vunpack.c.l.b16 %v144
  %v168 = vunpack.c.l.b16 %v145
  %v169 = vunpack.c.l.b16 %v146
  %v170 = vunpack.c.l.b16 %v147
  %v171 = vunpack.c.l.b16 %v148
  %v172 = vunpack.c.l.b16 %v149
  %v173 = vpack.c.b16 %v166, %v165
  %v174 = vpack.c.b16 %v168, %v167
  %v175 = vpack.c.b16 %v170, %v169
  %v176 = vpack.c.b16 %v172, %v171
  %vm181 = vcmask 523264
  %v183 = vsel %vm181, %v141, 0
  %185 = vmatprep.subr.bf16.mxu0 0
  %186 = vmatpush1.bf16.msra.mxu0 %v173
  %187 = vmatprep.subr.bf16.mxu0 0
  %188 = vmatpush1.bf16.msra.mxu0 %v174
  %189 = vmatprep.subr.bf16.mxu0 0
  %190 = vmatpush1.bf16.msra.mxu0 %v175
  %191 = vmatprep.subr.bf16.mxu0 0
  %192 = vmatpush1.bf16.msra.mxu0 %v176
  %193 = vmatprep.subr.bf16.mxu0 0
  %194 = vmatpush1.bf16.msra.mxu0 0
  %195 = vmatprep.subr.bf16.mxu0 0
  %196 = vmatpush1.bf16.msra.mxu0 0
  %197 = vmatprep.subr.bf16.mxu0 0
  %198 = vmatpush1.bf16.msra.mxu0 0
  %199 = vmatprep.subr.bf16.mxu0 0
  %200 = vmatpush1.bf16.msra.mxu0 0
  %201 = vmatprep.subr.bf16.mxu0 0
  %202 = vmatpush1.bf16.msra.mxu0 0
  %203 = vmatprep.subr.bf16.mxu0 0
  %204 = vmatpush1.bf16.msra.mxu0 0
  %205 = vmatprep.subr.bf16.mxu0 0
  %206 = vmatpush1.bf16.msra.mxu0 0
  %207 = vmatprep.subr.bf16.mxu0 0
  %208 = vmatpush1.bf16.msra.mxu0 0
  %209 = vmatprep.subr.bf16.mxu0 0
  %210 = vmatpush1.bf16.msra.mxu0 0
  %211 = vmatprep.subr.bf16.mxu0 0
  %212 = vmatpush1.bf16.msra.mxu0 0
  %213 = vmatprep.subr.bf16.mxu0 0
  %214 = vmatpush1.bf16.msra.mxu0 0
  %215 = vmatprep.subr.bf16.mxu0 0
  %216 = vmatpush1.bf16.msra.mxu0 0
  %217 = vmatprep.mubr.bf16.mxu0 0
  %218 = vmatmul.mubr.bf16.gmra.mrb[0].mxu0 %v183
  %v219 = vpop.f32.mrb[0].mxu0
  %v220 = vadd.f32 %v155, %v219
  %v221 = vpop.f32.mrb[0].mxu0
  %v222 = vpop.f32.mrb[0].mxu0
  %v223 = vpop.f32.mrb[0].mxu0
  %224 = vdwg.mxu0
  %v225 = vmax.f32 %v220, 0.0
  %v226 = vld [vmem:[%s5] sm:$0x1]
  %v228 = vlaneseq
  %v229 = vshrl.u32 %v228, 7
  %v230 = vsub.s32 0, %v229
  %v231 = vrot.slane %v226, %v230
  %v233 = vmul.f32 %v225, %v231
  %v234 = vsel %vm181, %v233, 0.0
  %235 = vadd.xlane.f32.xlu0 %v234
  %v236 = vpop.xlane.xlu0 %235
  %s237 = sld [smem:[#allocation2]]
  %v238 = vstv %s237
  %v239 = vadd.f32 %v236, %v238
  %vm240 = vcmask 7168
  %241 = vst.msk [vmem:[%s7] sm:$0xff] %vm240, %v239
  // Predicated region
  $region30: #{head_forward.1} parent=0 // pred_check
    _
  $region31: #{head_forward.1} parent=0 // pred_check_branch
    %243 = sbr.rel (0) target = $region33
  $region32: #{head_forward.1} parent=0 // pred_region
    _
  $region33: #{head_forward.1} parent=0 // pred_fallthru
    _
  // Predicated region
  $region34: #{head_forward.1} parent=0 // pred_check
    _
  $region35: #{head_forward.1} parent=0 // pred_check_branch
    %245 = sbr.rel (0) target = $region37
  $region36: #{head_forward.1} parent=0 // pred_region
    _
  $region37: #{head_forward.1} parent=0 // pred_fallthru
    _

</llo_original>
